<compile_context>
chip_gen: v5e
topology: v5e:2x2
jax: 0.10.0
libtpu: 0.0.40
codegen_flags: <defaults>
</compile_context>

<pallas_src>
import functools

import jax
import jax.numpy as jnp
from jax.experimental import pallas as pl
from jax.experimental.pallas import tpu as pltpu


_ADJ_DTYPE = jnp.bfloat16        # aggregation-operand dtype (halves HBM traffic)
_MiB = 1024 * 1024


def _round_up(x, m):
    return ((x + m - 1) // m) * m


def _tpu_budgets():
    """Per-generation VMEM budgets (v5e/v6e: 128 MiB; v7x: 64 MiB per TC)."""
    try:
        cap = int(pltpu.get_tpu_info().vmem_capacity_bytes)
    except Exception:                      # query unavailable -> assume small VMEM
        cap = 64 * _MiB
    if cap >= 100 * _MiB:                  # v5e / v6e (128 MiB VMEM)
        return dict(vmem_limit=100 * _MiB, tile_budget=80 * _MiB,
                    fused_adj_limit=80 * _MiB, fused_node_limit=None)
    # v7x-like (64 MiB VMEM/TC): keep headroom; prefer the 2-TC "parallel"
    # tiled path once the graph has more than a few hundred nodes.
    return dict(vmem_limit=44 * _MiB, tile_budget=28 * _MiB,
                fused_adj_limit=8 * _MiB, fused_node_limit=512)


def _pick_tm(n_pad, tile_budget):
    """Largest multiple-of-128 divisor of n_pad whose double-buffered
    (TM, 2*n_pad) bf16 adjacency slab fits the per-generation budget."""
    k = n_pad // 128
    itemsize = jnp.dtype(_ADJ_DTYPE).itemsize
    best = 128
    for m in range(1, k + 1):
        if k % m:
            continue
        tm = 128 * m
        if 2 * tm * (2 * n_pad) * itemsize <= tile_budget:
            best = tm
    return best


# ----------------------------- Pallas kernels ------------------------------

def _precompute_kernel(x_ref, w_ref, b_ref, xab_ref, xr_ref):
    # One (TM, D) @ (D, 3D) MXU pass per row tile: columns [A | B | root].
    d = x_ref.shape[1]
    y = jnp.dot(x_ref[...], w_ref[...], preferred_element_type=jnp.float32)
    xab_ref[0, :, :] = y[:, :d].astype(xab_ref.dtype)          # x @ A
    xab_ref[1, :, :] = y[:, d:2 * d].astype(xab_ref.dtype)     # x @ B
    xr_ref[...] = y[:, 2 * d:] + b_ref[...]                    # x @ root + bias


def _nnconv_agg_kernel(adj_ref, invdeg_ref, xr_ref, xab_ref, o_ref, *, apply_relu):
    # Row tile of the aggregation: single (TM, 2N) @ (2N, D) bf16 matmul with
    # f32 accumulation; adj = [adj1 | adj0], xab = [x@A ; x@B].
    agg = jnp.dot(adj_ref[...], xab_ref[...], preferred_element_type=jnp.float32)
    out = xr_ref[...] + agg * invdeg_ref[...]
    if apply_relu:
        out = jnp.maximum(out, 0.0)
    o_ref[...] = out


def _mpnn_fused_kernel(adj_ref, invdeg_ref, x_ref, w_ref, b_ref, o_ref,
                       *, n_encode, d):
    # Small-graph path: both layers in one kernel, adjacency read from HBM once.
    adj = adj_ref[...]                 # (N, 2N) bf16 = [adj1 | adj0]
    invdeg = invdeg_ref[...]
    h = x_ref[...]
    for layer in range(n_encode):
        y = jnp.dot(h, w_ref[layer], preferred_element_type=jnp.float32)
        xa = y[:, :d].astype(adj.dtype)
        xb = y[:, d:2 * d].astype(adj.dtype)
        xr = y[:, 2 * d:] + b_ref[layer]
        xab = jnp.concatenate([xa, xb], axis=0)                # (2N, D)
        agg = jnp.dot(adj, xab, preferred_element_type=jnp.float32)
        h = xr + agg * invdeg
        if layer == 0 and n_encode > 1:                        # relu after conv1 only
            h = jnp.maximum(h, 0.0)
    o_ref[...] = h


# ------------------------------ layer wrappers ------------------------------

def nnconv_layer_tiled(h, adj_cat, inv_deg, w_cat, bias_row, *, apply_relu, tm,
                       vmem_limit):
    """One NNConv layer; rows tiled over a 'parallel' grid (padded shapes)."""
    n_pad, d = h.shape
    grid = (n_pad // tm,)
    cparams = pltpu.CompilerParams(dimension_semantics=("parallel",),
                                   vmem_limit_bytes=vmem_limit)

    # (1) per-layer precompute: x@[A|B|root] in one MXU pass per tile.
    xab, xr = pl.pallas_call(
        _precompute_kernel,
        out_shape=(jax.ShapeDtypeStruct((2, n_pad, d), _ADJ_DTYPE),
                   jax.ShapeDtypeStruct((n_pad, d), jnp.float32)),
        grid=grid,
        in_specs=[pl.BlockSpec((tm, d), lambda i: (i, 0)),
                  pl.BlockSpec((d, 3 * d), lambda i: (0, 0)),
                  pl.BlockSpec((1, d), lambda i: (0, 0))],
        out_specs=(pl.BlockSpec((2, tm, d), lambda i: (0, i, 0)),
                   pl.BlockSpec((tm, d), lambda i: (i, 0))),
        compiler_params=cparams,
    )(h, w_cat, bias_row)
    xab_stacked = xab.reshape(2 * n_pad, d)        # contiguous -> free reshape

    # (2) row-tiled aggregation (dominant HBM traffic: the adjacency slab).
    adj_bytes = jnp.dtype(_ADJ_DTYPE).itemsize
    flops = 2 * n_pad * (2 * n_pad) * d
    bytes_acc = (n_pad * 2 * n_pad * adj_bytes          # [adj1 | adj0]
                 + 2 * n_pad * d * adj_bytes            # xab (resident)
                 + 2 * n_pad * d * 4 + n_pad * 4)       # xr, out, inv_deg
    out = pl.pallas_call(
        functools.partial(_nnconv_agg_kernel, apply_relu=apply_relu),
        out_shape=jax.ShapeDtypeStruct((n_pad, d), jnp.float32),
        grid=grid,
        in_specs=[pl.BlockSpec((tm, 2 * n_pad), lambda i: (i, 0)),
                  pl.BlockSpec((tm, 1), lambda i: (i, 0)),
                  pl.BlockSpec((tm, d), lambda i: (i, 0)),
                  pl.BlockSpec((2 * n_pad, d), lambda i: (0, 0))],
        out_specs=pl.BlockSpec((tm, d), lambda i: (i, 0)),
        compiler_params=cparams,
        cost_estimate=pl.CostEstimate(flops=int(flops), transcendentals=0,
                                      bytes_accessed=int(bytes_acc)),
    )(adj_cat, inv_deg, xr, xab_stacked)
    return out


def mpnn_fused(h, adj_cat, inv_deg, w_all, b_all, *, n_encode, vmem_limit):
    """Both layers in one pallas_call; adjacency resident in VMEM, read once."""
    n_pad, d = h.shape
    adj_bytes = jnp.dtype(_ADJ_DTYPE).itemsize
    flops = n_encode * (2 * n_pad * 2 * n_pad * d + 2 * n_pad * d * 3 * d)
    bytes_acc = n_pad * 2 * n_pad * adj_bytes + 3 * n_pad * d * 4 + n_pad * 4
    vmem = pl.BlockSpec(memory_space=pltpu.MemorySpace.VMEM)
    return pl.pallas_call(
        functools.partial(_mpnn_fused_kernel, n_encode=n_encode, d=d),
        out_shape=jax.ShapeDtypeStruct((n_pad, d), jnp.float32),
        in_specs=[vmem] * 5,
        out_specs=vmem,
        compiler_params=pltpu.CompilerParams(vmem_limit_bytes=vmem_limit),
        cost_estimate=pl.CostEstimate(flops=int(flops), transcendentals=0,
                                      bytes_accessed=int(bytes_acc)),
    )(adj_cat, inv_deg, h, w_all, b_all)


# ------------------------------- glue (JAX) --------------------------------

def build_dense_graph(edge_index, edge_attr, n_pad):
    """Dense padded adjacency; scatter stays in plain JAX (glue).

    Returns adj_cat = [adj1 | adj0] in bf16 (shape (n_pad, 2*n_pad)) and the
    f32 inverse degree (n_pad, 1). Padded rows/cols are zero, so padded nodes
    never contribute to real rows.
    """
    src = edge_index[0]
    dst = edge_index[1]
    e = edge_index.shape[1]
    adj0 = jnp.zeros((n_pad, n_pad), jnp.float32).at[dst, src].add(
        jnp.ones((e,), jnp.float32))
    adj1 = jnp.zeros((n_pad, n_pad), jnp.float32).at[dst, src].add(
        edge_attr[:, 0].astype(jnp.float32))
    deg = adj0.sum(axis=1, keepdims=True)
    inv_deg = jnp.where(deg > 0, 1.0 / jnp.maximum(deg, 1.0), 0.0)
    # edge counts are exact in bf16 (deg < 256); edge-attr sums lose ~3 mantissa
    # bits -> validated against the f32 reference with a relaxed tolerance.
    adj_cat = jnp.concatenate([adj1, adj0], axis=1).astype(_ADJ_DTYPE)
    return adj_cat, inv_deg


def init_params(key, embed_dim):
    d = embed_dim
    ks = jax.random.split(key, 10)
    s = 0.1
    p = dict(
        node_embed_w=jax.random.normal(ks[0], (d, 1)) * s,      # Linear(1, D).weight
        node_embed_b=jax.random.normal(ks[1], (d,)) * s,
        l1_w=jax.random.normal(ks[2], (d * d, 1)) * s,          # Linear(1, D*D).weight
        l1_b=jax.random.normal(ks[3], (d * d,)) * s,
        conv1_root=jax.random.normal(ks[4], (d, d)) * s,        # NNConv root weight
        conv1_bias=jax.random.normal(ks[5], (d,)) * s,
        l2_w=jax.random.normal(ks[6], (d * d, 1)) * s,
        l2_b=jax.random.normal(ks[7], (d * d,)) * s,
        conv2_root=jax.random.normal(ks[8], (d, d)) * s,
        conv2_bias=jax.random.normal(ks[9], (d,)) * s,
    )
    return jax.tree.map(lambda a: a.astype(jnp.float32), p)


def mpnn_forward(params, x, edge_index, edge_attr, i, *, u_size, batch_size,
                 embed_dim, n_layers, node_dim_u=1, node_dim_v=1,
                 tm=None, use_fused=None):
    # i is a host scalar (matches `i.item()` in the torch code)
    d = embed_dim
    graph_size = u_size + 1 + i
    n_encode = i + 1 if i < n_layers else n_layers
    num_nodes = batch_size * graph_size

    budgets = _tpu_budgets()

    # ---- node embedding: Linear(node_dim=1, D) is a VPU broadcast; plain JAX
    #      glue (no kernel launch, no K=1 MXU matmul, no extra HBM round trip).
    w_t = params["node_embed_w"].T                        # (node_dim, D)
    b = params["node_embed_b"][None, None, :]
    x_u = x[:, : node_dim_u * (u_size + 1)].reshape(batch_size, u_size + 1,
                                                    node_dim_u)
    h_u = x_u @ w_t + b
    if i > 0:
        x_v = x[:, node_dim_u * (u_size + 1):].reshape(batch_size, i, node_dim_v)
        h_v = x_v @ w_t + b     # node_dim_u == node_dim_v -> shared embedding
        h = jnp.concatenate((h_u, h_v), axis=1)
    else:
        h = h_u
    h = h.reshape(num_nodes, d).astype(jnp.float32)

    # Pad the node axis to a multiple of 128: lane-dense adjacency columns
    # (the matmul K axis) and bf16-friendly sublane counts.
    n_pad = _round_up(max(num_nodes, 128), 128)
    pad = n_pad - num_nodes
    if pad:
        h = jnp.pad(h, ((0, pad), (0, 0)))
    # Padded-row invariant: adjacency rows/cols and inv_deg for padded indices
    # are zero, so padded rows only carry relu(bias) and never reach real rows.
    adj_cat, inv_deg = build_dense_graph(edge_index, edge_attr, n_pad)

    # per-layer merged weights: (D, 3D) = [A | B | root] + bias row (1, D)
    def layer_w(lw, lb, root):
        return jnp.concatenate([lw[:, 0].reshape(d, d), lb.reshape(d, d), root],
                               axis=1)

    w1 = layer_w(params["l1_w"], params["l1_b"], params["conv1_root"])
    b1 = params["conv1_bias"][None, :]
    if n_layers > 1:
        w2 = layer_w(params["l2_w"], params["l2_b"], params["conv2_root"])
        b2 = params["conv2_bias"][None, :]

    if use_fused is None:
        adj_total = n_pad * (2 * n_pad) * jnp.dtype(_ADJ_DTYPE).itemsize
        use_fused = (n_encode > 1) and (adj_total <= budgets["fused_adj_limit"])
        if budgets["fused_node_limit"] is not None:
            use_fused = use_fused and (n_pad <= budgets["fused_node_limit"])

    if use_fused:
        ws = [w1] + [w2] * (n_encode - 1)
        bs = [b1] + [b2] * (n_encode - 1)
        w_all = jnp.stack(ws, axis=0)                    # (n_encode, D, 3D)
        b_all = jnp.stack(bs, axis=0)                    # (n_encode, 1, D)
        out = mpnn_fused(h, adj_cat, inv_deg, w_all, b_all, n_encode=n_encode,
                         vmem_limit=budgets["vmem_limit"])
        return out[:num_nodes]

    # ---- tiled path: TM must be a multiple of 128 that divides n_pad ----
    if tm is None or (tm % 128) or (n_pad % tm):
        tm = _pick_tm(n_pad, budgets["tile_budget"])

    for j in range(n_encode):
        wj, bj = (w1, b1) if j == 0 else (w2, b2)
        h = nnconv_layer_tiled(h, adj_cat, inv_deg, wj, bj,
                               apply_relu=(j == 0 and n_encode > 1), tm=tm,
                               vmem_limit=budgets["vmem_limit"])
    return h[:num_nodes]


# -------------------------- pure-JAX reference -----------------------------

def _nnconv_ref(x, edge_index, edge_attr, w_nn, b_nn, root, bias, apply_relu,
                num_nodes):
    d = x.shape[1]
    src, dst = edge_index[0], edge_index[1]
    w_e = (edge_attr @ w_nn.T + b_nn).reshape(-1, d, d)         # (E, D, D)
    msg = jnp.einsum("ed,edf->ef", x[src], w_e)
    summed = jnp.zeros((num_nodes, d), jnp.float32).at[dst].add(msg)
    cnt = jnp.zeros((num_nodes, 1), jnp.float32).at[dst].add(1.0)
    mean = jnp.where(cnt > 0, summed / jnp.maximum(cnt, 1.0), 0.0)
    out = x @ root + mean + bias[None, :]
    return jnp.maximum(out, 0.0) if apply_relu else out


def mpnn_forward_ref(params, x, edge_index, edge_attr, i, *, u_size, batch_size,
                     embed_dim, n_layers, node_dim_u=1, node_dim_v=1):
    d = embed_dim
    graph_size = u_size + 1 + i
    n_encode = i + 1 if i < n_layers else n_layers
    x_u = x[:, : node_dim_u * (u_size + 1)].reshape(batch_size, u_size + 1,
                                                    node_dim_u)
    x_v = x[:, node_dim_u * (u_size + 1):].reshape(batch_size, i, node_dim_v)
    emb = lambda t: t @ params["node_embed_w"].T + params["node_embed_b"]
    h = jnp.concatenate((emb(x_u), emb(x_v)), axis=1).reshape(
        batch_size * graph_size, d)
    num_nodes = batch_size * graph_size
    for j in range(n_encode):
        if j == 0:
            h = _nnconv_ref(h, edge_index, edge_attr, params["l1_w"],
                            params["l1_b"], params["conv1_root"],
                            params["conv1_bias"],
                            apply_relu=(n_encode > 1), num_nodes=num_nodes)
        else:
            h = _nnconv_ref(h, edge_index, edge_attr, params["l2_w"],
                            params["l2_b"], params["conv2_root"],
                            params["conv2_bias"],
                            apply_relu=False, num_nodes=num_nodes)
    return h


# ---------------------------------- main ------------------------------------

def _demo_case(key, batch_size, u_size, i):
    """Raw node features + bipartite edges (every v-node <-> every u-node)."""
    graph_size = u_size + 1 + i
    k_x, k_e = jax.random.split(key)
    x = jax.random.normal(k_x, (batch_size, (u_size + 1) + i), jnp.float32)
    srcs, dsts = [], []
    for b in range(batch_size):
        base = b * graph_size
        for v in range(i):
            v_idx = base + u_size + 1 + v
            for u in range(u_size + 1):
                u_idx = base + u
                srcs += [v_idx, u_idx]
                dsts += [u_idx, v_idx]
    edge_index = jnp.array([srcs, dsts], dtype=jnp.int32)      # (2, E)
    edge_attr = jax.random.uniform(k_e, (edge_index.shape[1], 1), jnp.float32)
    return x, edge_index, edge_attr


if __name__ == "__main__":
    key = jax.random.PRNGKey(0)
    k_p, k_a, k_b = jax.random.split(key, 3)
    embed_dim, n_layers = 32, 2
    params = init_params(k_p, embed_dim)

    # ---- case A: small graph (96 nodes -> n_pad = 128) ----
    bsA, usA, iA = 4, 15, 8
    xA, eiA, eaA = _demo_case(k_a, bsA, usA, iA)
    kwA = dict(u_size=usA, batch_size=bsA, embed_dim=embed_dim, n_layers=n_layers)
    refA = mpnn_forward_ref(params, xA, eiA, eaA, iA, **kwA)

    out_fused = mpnn_forward(params, xA, eiA, eaA, iA, use_fused=True, **kwA)
    out_fused = jax.block_until_ready(out_fused)
    assert out_fused.shape == (bsA * (usA + 1 + iA), embed_dim), out_fused.shape
    assert jnp.allclose(out_fused, refA, atol=2e-2, rtol=2e-2), "fused mismatch"

    out_tiledA = mpnn_forward(params, xA, eiA, eaA, iA, use_fused=False, **kwA)
    out_tiledA = jax.block_until_ready(out_tiledA)
    assert jnp.allclose(out_tiledA, refA, atol=2e-2, rtol=2e-2), "tiled-A mismatch"

    # ---- case B: larger graph (196 nodes -> n_pad = 256), real row grid ----
    bsB, usB, iB = 4, 40, 8
    xB, eiB, eaB = _demo_case(k_b, bsB, usB, iB)
    kwB = dict(u_size=usB, batch_size=bsB, embed_dim=embed_dim, n_layers=n_layers)
    out_tiledB = mpnn_forward(params, xB, eiB, eaB, iB, use_fused=False, tm=128,
                              **kwB)                       # grid of 2 row tiles
    out_tiledB = jax.block_until_ready(out_tiledB)
    refB = mpnn_forward_ref(params, xB, eiB, eaB, iB, **kwB)
    assert out_tiledB.shape == (bsB * (usB + 1 + iB), embed_dim), out_tiledB.shape
    assert jnp.allclose(out_tiledB, refB, atol=2e-2, rtol=2e-2), "tiled-B mismatch"

    print("KERNEL_OK")
</pallas_src>

<mosaic_0001>
module attributes {stable_mosaic.version = 11 : i64} {
  func.func @_mpnn_fused_kernel(%arg0: memref<128x256xbf16, #tpu.memory_space<vmem>>, %arg1: memref<128x1xf32, #tpu.memory_space<vmem>>, %arg2: memref<128x32xf32, #tpu.memory_space<vmem>>, %arg3: memref<2x32x96xf32, #tpu.memory_space<vmem>>, %arg4: memref<2x1x32xf32, #tpu.memory_space<vmem>>, %arg5: memref<128x32xf32, #tpu.memory_space<vmem>>) attributes {dimension_semantics = [], scalar_prefetch = 0 : i64, scratch_operands = 0 : i64, tpu.core_type = #tpu.core_type<tc>} {
    %c0 = arith.constant 0 : index
    %c0_0 = arith.constant 0 : index
    %0 = vector.load %arg0[%c0, %c0_0] : memref<128x256xbf16, #tpu.memory_space<vmem>>, vector<128x256xbf16>
    %c0_1 = arith.constant 0 : index
    %c0_2 = arith.constant 0 : index
    %1 = vector.load %arg1[%c0_1, %c0_2] : memref<128x1xf32, #tpu.memory_space<vmem>>, vector<128x1xf32>
    %c0_3 = arith.constant 0 : index
    %c0_4 = arith.constant 0 : index
    %2 = vector.load %arg2[%c0_3, %c0_4] : memref<128x32xf32, #tpu.memory_space<vmem>>, vector<128x32xf32>
    %c0_5 = arith.constant 0 : index
    %c0_6 = arith.constant 0 : index
    %c0_7 = arith.constant 0 : index
    %3 = vector.load %arg3[%c0_5, %c0_6, %c0_7] : memref<2x32x96xf32, #tpu.memory_space<vmem>>, vector<1x32x96xf32>
    %4 = vector.shape_cast %3 : vector<1x32x96xf32> to vector<32x96xf32>
    %cst = arith.constant dense<0.000000e+00> : vector<128x96xf32>
    %5 = tpu.matmul %2, %4, %cst {dimension_numbers = #tpu.dot_dimension_numbers<[1], [0], [0], [1], [0, 0, 1, 1], [], []>} : vector<128x32xf32>, vector<32x96xf32>, vector<128x96xf32> -> vector<128x96xf32>
    %6 = vector.extract_strided_slice %5 {offsets = [0, 0], sizes = [128, 32], strides = [1, 1]} : vector<128x96xf32> to vector<128x32xf32>
    %7 = arith.truncf %6 : vector<128x32xf32> to vector<128x32xbf16>
    %8 = vector.extract_strided_slice %5 {offsets = [0, 32], sizes = [128, 32], strides = [1, 1]} : vector<128x96xf32> to vector<128x32xf32>
    %9 = arith.truncf %8 : vector<128x32xf32> to vector<128x32xbf16>
    %10 = vector.extract_strided_slice %5 {offsets = [0, 64], sizes = [128, 32], strides = [1, 1]} : vector<128x96xf32> to vector<128x32xf32>
    %c0_8 = arith.constant 0 : index
    %c0_9 = arith.constant 0 : index
    %c0_10 = arith.constant 0 : index
    %11 = vector.load %arg4[%c0_8, %c0_9, %c0_10] : memref<2x1x32xf32, #tpu.memory_space<vmem>>, vector<1x1x32xf32>
    %12 = vector.shape_cast %11 : vector<1x1x32xf32> to vector<1x32xf32>
    %13 = vector.broadcast %12 : vector<1x32xf32> to vector<128x32xf32>
    %14 = arith.addf %10, %13 : vector<128x32xf32>
    %15 = tpu.concatenate %7, %9 in 0 : vector<128x32xbf16>, vector<128x32xbf16> -> vector<256x32xbf16>
    %cst_11 = arith.constant dense<0.000000e+00> : vector<128x32xf32>
    %16 = tpu.matmul %0, %15, %cst_11 {dimension_numbers = #tpu.dot_dimension_numbers<[1], [0], [0], [1], [0, 0, 1, 1], [], []>} : vector<128x256xbf16>, vector<256x32xbf16>, vector<128x32xf32> -> vector<128x32xf32>
    %17 = vector.broadcast %1 : vector<128x1xf32> to vector<128x32xf32>
    %18 = arith.mulf %16, %17 : vector<128x32xf32>
    %19 = arith.addf %14, %18 : vector<128x32xf32>
    %cst_12 = arith.constant 0.000000e+00 : f32
    %20 = vector.broadcast %cst_12 : f32 to vector<128x32xf32>
    %21 = arith.maximumf %19, %20 : vector<128x32xf32>
    %c1 = arith.constant 1 : index
    %c0_13 = arith.constant 0 : index
    %c0_14 = arith.constant 0 : index
    %22 = vector.load %arg3[%c1, %c0_13, %c0_14] : memref<2x32x96xf32, #tpu.memory_space<vmem>>, vector<1x32x96xf32>
    %23 = vector.shape_cast %22 : vector<1x32x96xf32> to vector<32x96xf32>
    %cst_15 = arith.constant dense<0.000000e+00> : vector<128x96xf32>
    %24 = tpu.matmul %21, %23, %cst_15 {dimension_numbers = #tpu.dot_dimension_numbers<[1], [0], [0], [1], [0, 0, 1, 1], [], []>} : vector<128x32xf32>, vector<32x96xf32>, vector<128x96xf32> -> vector<128x96xf32>
    %25 = vector.extract_strided_slice %24 {offsets = [0, 0], sizes = [128, 32], strides = [1, 1]} : vector<128x96xf32> to vector<128x32xf32>
    %26 = arith.truncf %25 : vector<128x32xf32> to vector<128x32xbf16>
    %27 = vector.extract_strided_slice %24 {offsets = [0, 32], sizes = [128, 32], strides = [1, 1]} : vector<128x96xf32> to vector<128x32xf32>
    %28 = arith.truncf %27 : vector<128x32xf32> to vector<128x32xbf16>
    %29 = vector.extract_strided_slice %24 {offsets = [0, 64], sizes = [128, 32], strides = [1, 1]} : vector<128x96xf32> to vector<128x32xf32>
    %c1_16 = arith.constant 1 : index
    %c0_17 = arith.constant 0 : index
    %c0_18 = arith.constant 0 : index
    %30 = vector.load %arg4[%c1_16, %c0_17, %c0_18] : memref<2x1x32xf32, #tpu.memory_space<vmem>>, vector<1x1x32xf32>
    %31 = vector.shape_cast %30 : vector<1x1x32xf32> to vector<1x32xf32>
    %32 = vector.broadcast %31 : vector<1x32xf32> to vector<128x32xf32>
    %33 = arith.addf %29, %32 : vector<128x32xf32>
    %34 = tpu.concatenate %26, %28 in 0 : vector<128x32xbf16>, vector<128x32xbf16> -> vector<256x32xbf16>
    %cst_19 = arith.constant dense<0.000000e+00> : vector<128x32xf32>
    %35 = tpu.matmul %0, %34, %cst_19 {dimension_numbers = #tpu.dot_dimension_numbers<[1], [0], [0], [1], [0, 0, 1, 1], [], []>} : vector<128x256xbf16>, vector<256x32xbf16>, vector<128x32xf32> -> vector<128x32xf32>
    %36 = vector.broadcast %1 : vector<128x1xf32> to vector<128x32xf32>
    %37 = arith.mulf %35, %36 : vector<128x32xf32>
    %38 = arith.addf %33, %37 : vector<128x32xf32>
    %c0_20 = arith.constant 0 : index
    %c0_21 = arith.constant 0 : index
    %39 = vector.load %arg5[%c0_20, %c0_21] : memref<128x32xf32, #tpu.memory_space<vmem>>, vector<128x32xf32>
    tpu.vector_store %arg5[%c0_20, %c0_21], %38 {strides = array<i32>} : memref<128x32xf32, #tpu.memory_space<vmem>>, vector<128x32xf32>,
    return
  }
}

</mosaic_0001>

<llo_original>
// kernel: tpu_custom_call.1
$region0: #{tpu_custom_call.1}
  #allocation0 [shape = 'u32[]', space=smem, size = 0x4, offset = 0x4, fixed_abs, tag = 'smem constant byte address 0x4 - core index']
  #allocation1 [shape = 'u32[72,128]{1,0:T(1,128)}', space=vmem, size = 0x9000, scoped, tag = 'internal scratch']
  %s0 = inlined_call_operand.vmem [shape: bf16[128,256], index: 0, kind: input, shape index: {}]
  %s1 = inlined_call_operand.vmem [shape: f32[128,1], index: 1, kind: input, shape index: {}]
  %s2 = inlined_call_operand.vmem [shape: f32[128,32], index: 2, kind: input, shape index: {}]
  %s3 = inlined_call_operand.vmem [shape: f32[2,32,96], index: 3, kind: input, shape index: {}]
  %s4 = inlined_call_operand.vmem [shape: f32[2,1,32], index: 4, kind: input, shape index: {}]
  %s5 = inlined_call_operand.vmem [shape: f32[128,32], index: 5, kind: output, shape index: {}]
  %s6 = sld [smem:[#allocation0]]
  $region30: #{tpu_custom_call.1} parent=0
    _
  %s8 = ssub.s32 1, %s6
  %s9 = scalar_select 0, %s8, %s6
  // Predicated region
  $region2: #{tpu_custom_call.1} parent=0 // pred_check
    _
  $region3: #{tpu_custom_call.1} parent=0 // pred_check_branch
    %11 = sbr.rel (0) target = $region5
  $region4: #{tpu_custom_call.1} parent=0 // pred_region
    _
  $region5: #{tpu_custom_call.1} parent=0 // pred_fallthru
    _
  // Predicated region
  $region6: #{tpu_custom_call.1} parent=0 // pred_check
    _
  $region7: #{tpu_custom_call.1} parent=0 // pred_check_branch
    %13 = sbr.rel (0) target = $region9
  $region8: #{tpu_custom_call.1} parent=0 // pred_region
    _
  $region9: #{tpu_custom_call.1} parent=0 // pred_fallthru
    _
  // Predicated region
  $region10: #{tpu_custom_call.1} parent=0 // pred_check
    _
  $region11: #{tpu_custom_call.1} parent=0 // pred_check_branch
    %15 = sbr.rel (0) target = $region13
  $region12: #{tpu_custom_call.1} parent=0 // pred_region
    _
  $region13: #{tpu_custom_call.1} parent=0 // pred_fallthru
    _
  // Predicated region
  $region14: #{tpu_custom_call.1} parent=0 // pred_check
    _
  $region15: #{tpu_custom_call.1} parent=0 // pred_check_branch
    %17 = sbr.rel (0) target = $region17
  $region16: #{tpu_custom_call.1} parent=0 // pred_region
    _
  $region17: #{tpu_custom_call.1} parent=0 // pred_fallthru
    _
  // Predicated region
  $region18: #{tpu_custom_call.1} parent=0 // pred_check
    _
  $region19: #{tpu_custom_call.1} parent=0 // pred_check_branch
    %19 = sbr.rel (0) target = $region21
  $region20: #{tpu_custom_call.1} parent=0 // pred_region
    _
  $region21: #{tpu_custom_call.1} parent=0 // pred_fallthru
    _
  %v20 = vld [vmem:[%s0] sm:$0xff]
  %v21 = vld [vmem:[%s0 + $0x8] sm:$0xff]
  %v22 = vld [vmem:[%s0 + $0x10] sm:$0xff]
  %v23 = vld [vmem:[%s0 + $0x18] sm:$0xff]
  %v24 = vld [vmem:[%s0 + $0x20] sm:$0xff]
  %v25 = vld [vmem:[%s0 + $0x28] sm:$0xff]
  %v26 = vld [vmem:[%s0 + $0x30] sm:$0xff]
  %v27 = vld [vmem:[%s0 + $0x38] sm:$0xff]
  %v28 = vld [vmem:[%s0 + $0x40] sm:$0xff]
  %v29 = vld [vmem:[%s0 + $0x48] sm:$0xff]
  %v30 = vld [vmem:[%s0 + $0x50] sm:$0xff]
  %v31 = vld [vmem:[%s0 + $0x58] sm:$0xff]
  %v32 = vld [vmem:[%s0 + $0x60] sm:$0xff]
  %v33 = vld [vmem:[%s0 + $0x68] sm:$0xff]
  %v34 = vld [vmem:[%s0 + $0x70] sm:$0xff]
  %v35 = vld [vmem:[%s0 + $0x78] sm:$0xff]
  %v36 = vld [vmem:[%s1] sm:$0xff]
  %v37 = vld [vmem:[%s1 + $0x8] sm:$0xff]
  %v38 = vld [vmem:[%s1 + $0x10] sm:$0xff]
  %v39 = vld [vmem:[%s1 + $0x18] sm:$0xff]
  %v40 = vld [vmem:[%s1 + $0x20] sm:$0xff]
  %v41 = vld [vmem:[%s1 + $0x28] sm:$0xff]
  %v42 = vld [vmem:[%s1 + $0x30] sm:$0xff]
  %v43 = vld [vmem:[%s1 + $0x38] sm:$0xff]
  %v44 = vld [vmem:[%s1 + $0x40] sm:$0xff]
  %v45 = vld [vmem:[%s1 + $0x48] sm:$0xff]
  %v46 = vld [vmem:[%s1 + $0x50] sm:$0xff]
  %v47 = vld [vmem:[%s1 + $0x58] sm:$0xff]
  %v48 = vld [vmem:[%s1 + $0x60] sm:$0xff]
  %v49 = vld [vmem:[%s1 + $0x68] sm:$0xff]
  %v50 = vld [vmem:[%s1 + $0x70] sm:$0xff]
  %v51 = vld [vmem:[%s1 + $0x78] sm:$0xff]
  %v52 = vld [vmem:[%s2] sm:$0xff]
  %v53 = vld [vmem:[%s2 + $0x8] sm:$0xff]
  %v54 = vld [vmem:[%s2 + $0x10] sm:$0xff]
  %v55 = vld [vmem:[%s2 + $0x18] sm:$0xff]
  %v56 = vld [vmem:[%s2 + $0x20] sm:$0xff]
  %v57 = vld [vmem:[%s2 + $0x28] sm:$0xff]
  %v58 = vld [vmem:[%s2 + $0x30] sm:$0xff]
  %v59 = vld [vmem:[%s2 + $0x38] sm:$0xff]
  %v60 = vld [vmem:[%s2 + $0x40] sm:$0xff]
  %v61 = vld [vmem:[%s2 + $0x48] sm:$0xff]
  %v62 = vld [vmem:[%s2 + $0x50] sm:$0xff]
  %v63 = vld [vmem:[%s2 + $0x58] sm:$0xff]
  %v64 = vld [vmem:[%s2 + $0x60] sm:$0xff]
  %v65 = vld [vmem:[%s2 + $0x68] sm:$0xff]
  %v66 = vld [vmem:[%s2 + $0x70] sm:$0xff]
  %v67 = vld [vmem:[%s2 + $0x78] sm:$0xff]
  %v68 = vld [vmem:[%s3] sm:$0xff]
  %v69 = vld [vmem:[%s3 + $0x8] sm:$0xff]
  %v70 = vld [vmem:[%s3 + $0x10] sm:$0xff]
  %v71 = vld [vmem:[%s3 + $0x18] sm:$0xff]
  %vm72 = vcmask 261120
  %v74 = vsel %vm72, %v52, 0
  %v77 = vsel %vm72, %v53, 0
  %v80 = vsel %vm72, %v54, 0
  %v83 = vsel %vm72, %v55, 0
  %v86 = vsel %vm72, %v56, 0
  %v89 = vsel %vm72, %v57, 0
  %v92 = vsel %vm72, %v58, 0
  %v95 = vsel %vm72, %v59, 0
  %v98 = vsel %vm72, %v60, 0
  %v101 = vsel %vm72, %v61, 0
  %v104 = vsel %vm72, %v62, 0
  %v107 = vsel %vm72, %v63, 0
  %v110 = vsel %vm72, %v64, 0
  %v113 = vsel %vm72, %v65, 0
  %v116 = vsel %vm72, %v66, 0
  %v119 = vsel %vm72, %v67, 0
  %121 = vmatpush.msra.mxu0 0.0
  %122 = vmatpush.msra.mxu0 0.0
  %123 = vmatpush.msra.mxu0 0.0
  %124 = vmatpush.msra.mxu0 0.0
  %125 = vmatpush.msra.mxu0 0.0
  %126 = vmatpush.msra.mxu0 0.0
  %127 = vmatpush.msra.mxu0 0.0
  %128 = vmatpush.msra.mxu0 0.0
  %129 = vmatpush.msra.mxu0 0.0
  %130 = vmatpush.msra.mxu0 0.0
  %131 = vmatpush.msra.mxu0 0.0
  %132 = vmatpush.msra.mxu0 0.0
  %133 = vmatpush.msra.mxu0 %v71
  %134 = vmatpush.msra.mxu0 %v70
  %135 = vmatpush.msra.mxu0 %v69
  %136 = vmatpush.msra.mxu0 %v68
  %137 = vmatmul.f32.gmra.mxu0 %v74
  %v138 = vpop.f32.mrf.mxu0
  %v139 = vadd.f32 0.0, %v138
  %140 = vmatmul.f32.gmra.mxu0 %v77
  %v141 = vpop.f32.mrf.mxu0
  %v142 = vadd.f32 0.0, %v141
  %143 = vmatmul.f32.gmra.mxu0 %v80
  %v144 = vpop.f32.mrf.mxu0
  %v145 = vadd.f32 0.0, %v144
  %146 = vmatmul.f32.gmra.mxu0 %v83
  %v147 = vpop.f32.mrf.mxu0
  %v148 = vadd.f32 0.0, %v147
  %149 = vmatmul.f32.gmra.mxu0 %v86
  %v150 = vpop.f32.mrf.mxu0
  %v151 = vadd.f32 0.0, %v150
  %152 = vmatmul.f32.gmra.mxu0 %v89
  %v153 = vpop.f32.mrf.mxu0
  %v154 = vadd.f32 0.0, %v153
  %155 = vmatmul.f32.gmra.mxu0 %v92
  %v156 = vpop.f32.mrf.mxu0
  %v157 = vadd.f32 0.0, %v156
  %158 = vmatmul.f32.gmra.mxu0 %v95
  %v159 = vpop.f32.mrf.mxu0
  %v160 = vadd.f32 0.0, %v159
  %161 = vmatmul.f32.gmra.mxu0 %v98
  %v162 = vpop.f32.mrf.mxu0
  %v163 = vadd.f32 0.0, %v162
  %164 = vmatmul.f32.gmra.mxu0 %v101
  %v165 = vpop.f32.mrf.mxu0
  %v166 = vadd.f32 0.0, %v165
  %167 = vmatmul.f32.gmra.mxu0 %v104
  %v168 = vpop.f32.mrf.mxu0
  %v169 = vadd.f32 0.0, %v168
  %170 = vmatmul.f32.gmra.mxu0 %v107
  %v171 = vpop.f32.mrf.mxu0
  %v172 = vadd.f32 0.0, %v171
  %173 = vmatmul.f32.gmra.mxu0 %v110
  %v174 = vpop.f32.mrf.mxu0
  %v175 = vadd.f32 0.0, %v174
  %176 = vmatmul.f32.gmra.mxu0 %v113
  %v177 = vpop.f32.mrf.mxu0
  %v178 = vadd.f32 0.0, %v177
  %179 = vmatmul.f32.gmra.mxu0 %v116
  %v180 = vpop.f32.mrf.mxu0
  %v181 = vadd.f32 0.0, %v180
  %182 = vmatmul.f32.gmra.mxu0 %v119
  %v183 = vpop.f32.mrf.mxu0
  %v184 = vadd.f32 0.0, %v183
  %185 = vdwg.mxu0
  %v186 = vpack.c.bf16 %v139, %v139
  %v187 = vpack.c.bf16 %v142, %v142
  %v188 = vpack.c.bf16 %v145, %v145
  %v189 = vpack.c.bf16 %v148, %v148
  %v190 = vpack.c.bf16 %v151, %v151
  %v191 = vpack.c.bf16 %v154, %v154
  %v192 = vpack.c.bf16 %v157, %v157
  %v193 = vpack.c.bf16 %v160, %v160
  %v194 = vpack.c.bf16 %v163, %v163
  %v195 = vpack.c.bf16 %v166, %v166
  %v196 = vpack.c.bf16 %v169, %v169
  %v197 = vpack.c.bf16 %v172, %v172
  %v198 = vpack.c.bf16 %v175, %v175
  %v199 = vpack.c.bf16 %v178, %v178
  %v200 = vpack.c.bf16 %v181, %v181
  %v201 = vpack.c.bf16 %v184, %v184
  %v202 = vld [vmem:[%s4] sm:$0x1]
  %v204 = vperm.slane %v202, 0
  %205 = vrot.lane.b32.xlu0 %v204, 64
  %v206 = vpop.permute.xlu0 %205
  %v208 = vadd.f32 %v139, %v206
  %v209 = vadd.f32 %v142, %v206
  %v210 = vadd.f32 %v145, %v206
  %v211 = vadd.f32 %v148, %v206
  %v212 = vadd.f32 %v151, %v206
  %v213 = vadd.f32 %v154, %v206
  %v214 = vadd.f32 %v157, %v206
  %v215 = vadd.f32 %v160, %v206
  %v216 = vadd.f32 %v163, %v206
  %v217 = vadd.f32 %v166, %v206
  %v218 = vadd.f32 %v169, %v206
  %v219 = vadd.f32 %v172, %v206
  %v220 = vadd.f32 %v175, %v206
  %v221 = vadd.f32 %v178, %v206
  %v222 = vadd.f32 %v181, %v206
  %v223 = vadd.f32 %v184, %v206
  %v240 = vunpack.c.l.b16 %v186
  %v241 = vunpack.c.l.b16 %v187
  %v242 = vunpack.c.l.b16 %v188
  %v243 = vunpack.c.l.b16 %v189
  %v244 = vunpack.c.l.b16 %v190
  %v245 = vunpack.c.l.b16 %v191
  %v246 = vunpack.c.l.b16 %v192
  %v247 = vunpack.c.l.b16 %v193
  %v248 = vunpack.c.l.b16 %v194
  %v249 = vunpack.c.l.b16 %v195
  %v250 = vunpack.c.l.b16 %v196
  %v251 = vunpack.c.l.b16 %v197
  %v252 = vunpack.c.l.b16 %v198
  %v253 = vunpack.c.l.b16 %v199
  %v254 = vunpack.c.l.b16 %v200
  %v255 = vunpack.c.l.b16 %v201
  %v256 = vpack.c.b16 %v241, %v240
  %v257 = vpack.c.b16 %v243, %v242
  %v258 = vpack.c.b16 %v245, %v244
  %v259 = vpack.c.b16 %v247, %v246
  %v260 = vpack.c.b16 %v249, %v248
  %v261 = vpack.c.b16 %v251, %v250
  %v262 = vpack.c.b16 %v253, %v252
  %v263 = vpack.c.b16 %v255, %v254
  %272 = vrot.lane.b32.xlu0 %v256, 96
  %v273 = vpop.permute.xlu0 %272
  %274 = vrot.lane.b32.xlu0 %v257, 96
  %v275 = vpop.permute.xlu0 %274
  %276 = vrot.lane.b32.xlu0 %v258, 96
  %v277 = vpop.permute.xlu0 %276
  %278 = vrot.lane.b32.xlu0 %v259, 96
  %v279 = vpop.permute.xlu0 %278
  %280 = vrot.lane.b32.xlu0 %v260, 96
  %v281 = vpop.permute.xlu0 %280
  %282 = vrot.lane.b32.xlu0 %v261, 96
  %v283 = vpop.permute.xlu0 %282
  %284 = vrot.lane.b32.xlu0 %v262, 96
  %v285 = vpop.permute.xlu0 %284
  %286 = vrot.lane.b32.xlu0 %v263, 96
  %v287 = vpop.permute.xlu0 %286
  %v312 = vunpack.c.l.b16 %v20
  %v313 = vunpack.c.h.b16 %v20
  %v314 = vunpack.c.l.b16 %v21
  %v315 = vunpack.c.h.b16 %v21
  %v316 = vunpack.c.l.b16 %v22
  %v317 = vunpack.c.h.b16 %v22
  %v318 = vunpack.c.l.b16 %v23
  %v319 = vunpack.c.h.b16 %v23
  %v320 = vunpack.c.l.b16 %v24
  %v321 = vunpack.c.h.b16 %v24
  %v322 = vunpack.c.l.b16 %v25
  %v323 = vunpack.c.h.b16 %v25
  %v324 = vunpack.c.l.b16 %v26
  %v325 = vunpack.c.h.b16 %v26
  %v326 = vunpack.c.l.b16 %v27
  %v327 = vunpack.c.h.b16 %v27
  %v328 = vunpack.c.l.b16 %v28
  %v329 = vunpack.c.h.b16 %v28
  %v330 = vunpack.c.l.b16 %v29
  %v331 = vunpack.c.h.b16 %v29
  %v332 = vunpack.c.l.b16 %v30
  %v333 = vunpack.c.h.b16 %v30
  %v334 = vunpack.c.l.b16 %v31
  %v335 = vunpack.c.h.b16 %v31
  %v336 = vunpack.c.l.b16 %v32
  %v337 = vunpack.c.h.b16 %v32
  %v338 = vunpack.c.l.b16 %v33
  %v339 = vunpack.c.h.b16 %v33
  %v340 = vunpack.c.l.b16 %v34
  %v341 = vunpack.c.h.b16 %v34
  %v342 = vunpack.c.l.b16 %v35
  %v343 = vunpack.c.h.b16 %v35
  %v344 = vpack.c.b16 %v314, %v312
  %v345 = vpack.c.b16 %v315, %v313
  %v346 = vpack.c.b16 %v318, %v316
  %v347 = vpack.c.b16 %v319, %v317
  %v348 = vpack.c.b16 %v322, %v320
  %v349 = vpack.c.b16 %v323, %v321
  %v350 = vpack.c.b16 %v326, %v324
  %v351 = vpack.c.b16 %v327, %v325
  %v352 = vpack.c.b16 %v330, %v328
  %v353 = vpack.c.b16 %v331, %v329
  %v354 = vpack.c.b16 %v334, %v332
  %v355 = vpack.c.b16 %v335, %v333
  %v356 = vpack.c.b16 %v338, %v336
  %v357 = vpack.c.b16 %v339, %v337
  %v358 = vpack.c.b16 %v342, %v340
  %v359 = vpack.c.b16 %v343, %v341
  %376 = vmatpush.bf16.msra.mxu0 %v263
  %377 = vmatpush.bf16.msra.mxu0 %v262
  %378 = vmatpush.bf16.msra.mxu0 %v261
  %379 = vmatpush.bf16.msra.mxu0 %v260
  %380 = vmatpush.bf16.msra.mxu0 %v259
  %381 = vmatpush.bf16.msra.mxu0 %v258
  %382 = vmatpush.bf16.msra.mxu0 %v257
  %383 = vmatpush.bf16.msra.mxu0 %v256
  %384 = vmatmul.bf16.gmra.mxu0 %v344
  %v385 = vpop.f32.mrf.mxu0
  %v386 = vadd.f32 0.0, %v385
  %v387 = vpop.f32.mrf.mxu0
  %v388 = vadd.f32 0.0, %v387
  %389 = vmatmul.bf16.gmra.mxu0 %v346
  %v390 = vpop.f32.mrf.mxu0
  %v391 = vadd.f32 0.0, %v390
  %v392 = vpop.f32.mrf.mxu0
  %v393 = vadd.f32 0.0, %v392
  %394 = vmatmul.bf16.gmra.mxu0 %v348
  %v395 = vpop.f32.mrf.mxu0
  %v396 = vadd.f32 0.0, %v395
  %v397 = vpop.f32.mrf.mxu0
  %v398 = vadd.f32 0.0, %v397
  %399 = vmatmul.bf16.gmra.mxu0 %v350
  %v400 = vpop.f32.mrf.mxu0
  %v401 = vadd.f32 0.0, %v400
  %v402 = vpop.f32.mrf.mxu0
  %v403 = vadd.f32 0.0, %v402
  %404 = vmatmul.bf16.gmra.mxu0 %v352
  %v405 = vpop.f32.mrf.mxu0
  %v406 = vadd.f32 0.0, %v405
  %v407 = vpop.f32.mrf.mxu0
  %v408 = vadd.f32 0.0, %v407
  %409 = vmatmul.bf16.gmra.mxu0 %v354
  %v410 = vpop.f32.mrf.mxu0
  %v411 = vadd.f32 0.0, %v410
  %v412 = vpop.f32.mrf.mxu0
  %v413 = vadd.f32 0.0, %v412
  %414 = vmatmul.bf16.gmra.mxu0 %v356
  %v415 = vpop.f32.mrf.mxu0
  %v416 = vadd.f32 0.0, %v415
  %v417 = vpop.f32.mrf.mxu0
  %v418 = vadd.f32 0.0, %v417
  %419 = vmatmul.bf16.gmra.mxu0 %v358
  %v420 = vpop.f32.mrf.mxu0
  %v421 = vadd.f32 0.0, %v420
  %v422 = vpop.f32.mrf.mxu0
  %v423 = vadd.f32 0.0, %v422
  %424 = vdwg.mxu0
  %425 = vmatpush.bf16.msra.mxu0 %v287
  %426 = vmatpush.bf16.msra.mxu0 %v285
  %427 = vmatpush.bf16.msra.mxu0 %v283
  %428 = vmatpush.bf16.msra.mxu0 %v281
  %429 = vmatpush.bf16.msra.mxu0 %v279
  %430 = vmatpush.bf16.msra.mxu0 %v277
  %431 = vmatpush.bf16.msra.mxu0 %v275
  %432 = vmatpush.bf16.msra.mxu0 %v273
  %433 = vmatmul.bf16.gmra.mxu0 %v345
  %v434 = vpop.f32.mrf.mxu0
  %v435 = vadd.f32 %v386, %v434
  %v436 = vpop.f32.mrf.mxu0
  %v437 = vadd.f32 %v388, %v436
  %438 = vmatmul.bf16.gmra.mxu0 %v347
  %v439 = vpop.f32.mrf.mxu0
  %v440 = vadd.f32 %v391, %v439
  %v441 = vpop.f32.mrf.mxu0
  %v442 = vadd.f32 %v393, %v441
  %443 = vmatmul.bf16.gmra.mxu0 %v349
  %v444 = vpop.f32.mrf.mxu0
  %v445 = vadd.f32 %v396, %v444
  %v446 = vpop.f32.mrf.mxu0
  %v447 = vadd.f32 %v398, %v446
  %448 = vmatmul.bf16.gmra.mxu0 %v351
  %v449 = vpop.f32.mrf.mxu0
  %v450 = vadd.f32 %v401, %v449
  %v451 = vpop.f32.mrf.mxu0
  %v452 = vadd.f32 %v403, %v451
  %453 = vmatmul.bf16.gmra.mxu0 %v353
  %v454 = vpop.f32.mrf.mxu0
  %v455 = vadd.f32 %v406, %v454
  %v456 = vpop.f32.mrf.mxu0
  %v457 = vadd.f32 %v408, %v456
  %458 = vmatmul.bf16.gmra.mxu0 %v355
  %v459 = vpop.f32.mrf.mxu0
  %v460 = vadd.f32 %v411, %v459
  %v461 = vpop.f32.mrf.mxu0
  %v462 = vadd.f32 %v413, %v461
  %463 = vmatmul.bf16.gmra.mxu0 %v357
  %v464 = vpop.f32.mrf.mxu0
  %v465 = vadd.f32 %v416, %v464
  %v466 = vpop.f32.mrf.mxu0
  %v467 = vadd.f32 %v418, %v466
  %468 = vmatmul.bf16.gmra.mxu0 %v359
  %v469 = vpop.f32.mrf.mxu0
  %v470 = vadd.f32 %v421, %v469
  %v471 = vpop.f32.mrf.mxu0
  %v472 = vadd.f32 %v423, %v471
  %473 = vdwg.mxu0
  %475 = vset.pattern.permute.xlu0 0
  %476 = vperm.xlu0 %475, %v36
  %v477 = vpop.permute.xlu0 %476
  %480 = vset.pattern.permute.xlu0 0
  %481 = vperm.xlu0 %480, %v37
  %v482 = vpop.permute.xlu0 %481
  %485 = vset.pattern.permute.xlu0 0
  %486 = vperm.xlu0 %485, %v38
  %v487 = vpop.permute.xlu0 %486
  %490 = vset.pattern.permute.xlu0 0
  %491 = vperm.xlu0 %490, %v39
  %v492 = vpop.permute.xlu0 %491
  %495 = vset.pattern.permute.xlu0 0
  %496 = vperm.xlu0 %495, %v40
  %v497 = vpop.permute.xlu0 %496
  %500 = vset.pattern.permute.xlu0 0
  %501 = vperm.xlu0 %500, %v41
  %v502 = vpop.permute.xlu0 %501
  %505 = vset.pattern.permute.xlu0 0
  %506 = vperm.xlu0 %505, %v42
  %v507 = vpop.permute.xlu0 %506
  %510 = vset.pattern.permute.xlu0 0
  %511 = vperm.xlu0 %510, %v43
  %v512 = vpop.permute.xlu0 %511
  %515 = vset.pattern.permute.xlu0 0
  %516 = vperm.xlu0 %515, %v44
  %v517 = vpop.permute.xlu0 %516
  %520 = vset.pattern.permute.xlu0 0
  %521 = vperm.xlu0 %520, %v45
  %v522 = vpop.permute.xlu0 %521
  %525 = vset.pattern.permute.xlu0 0
  %526 = vperm.xlu0 %525, %v46
  %v527 = vpop.permute.xlu0 %526
  %530 = vset.pattern.permute.xlu0 0
  %531 = vperm.xlu0 %530, %v47
  %v532 = vpop.permute.xlu0 %531
  %535 = vset.pattern.permute.xlu0 0
  %536 = vperm.xlu0 %535, %v48
  %v537 = vpop.permute.xlu0 %536
  %540 = vset.pattern.permute.xlu0 0
  %541 = vperm.xlu0 %540, %v49
  %v542 = vpop.permute.xlu0 %541
  %545 = vset.pattern.permute.xlu0 0
  %546 = vperm.xlu0 %545, %v50
  %v547 = vpop.permute.xlu0 %546
  %550 = vset.pattern.permute.xlu0 0
  %551 = vperm.xlu0 %550, %v51
  %v552 = vpop.permute.xlu0 %551
  %v554 = vmul.f32 %v435, %v477
  %v555 = vmul.f32 %v437, %v482
  %v556 = vmul.f32 %v440, %v487
  %v557 = vmul.f32 %v442, %v492
  %v558 = vmul.f32 %v445, %v497
  %v559 = vmul.f32 %v447, %v502
  %v560 = vmul.f32 %v450, %v507
  %v561 = vmul.f32 %v452, %v512
  %v562 = vmul.f32 %v455, %v517
  %v563 = vmul.f32 %v457, %v522
  %v564 = vmul.f32 %v460, %v527
  %v565 = vmul.f32 %v462, %v532
  %v566 = vmul.f32 %v465, %v537
  %v567 = vmul.f32 %v467, %v542
  %v568 = vmul.f32 %v470, %v547
  %v569 = vmul.f32 %v472, %v552
  %586 = vrot.lane.b32.xlu0 %v554, 64
  %v587 = vpop.permute.xlu0 %586
  %588 = vrot.lane.b32.xlu0 %v555, 64
  %v589 = vpop.permute.xlu0 %588
  %590 = vrot.lane.b32.xlu0 %v556, 64
  %v591 = vpop.permute.xlu0 %590
  %592 = vrot.lane.b32.xlu0 %v557, 64
  %v593 = vpop.permute.xlu0 %592
  %594 = vrot.lane.b32.xlu0 %v558, 64
  %v595 = vpop.permute.xlu0 %594
  %596 = vrot.lane.b32.xlu0 %v559, 64
  %v597 = vpop.permute.xlu0 %596
  %598 = vrot.lane.b32.xlu0 %v560, 64
  %v599 = vpop.permute.xlu0 %598
  %600 = vrot.lane.b32.xlu0 %v561, 64
  %v601 = vpop.permute.xlu0 %600
  %602 = vrot.lane.b32.xlu0 %v562, 64
  %v603 = vpop.permute.xlu0 %602
  %604 = vrot.lane.b32.xlu0 %v563, 64
  %v605 = vpop.permute.xlu0 %604
  %606 = vrot.lane.b32.xlu0 %v564, 64
  %v607 = vpop.permute.xlu0 %606
  %608 = vrot.lane.b32.xlu0 %v565, 64
  %v609 = vpop.permute.xlu0 %608
  %610 = vrot.lane.b32.xlu0 %v566, 64
  %v611 = vpop.permute.xlu0 %610
  %612 = vrot.lane.b32.xlu0 %v567, 64
  %v613 = vpop.permute.xlu0 %612
  %614 = vrot.lane.b32.xlu0 %v568, 64
  %v615 = vpop.permute.xlu0 %614
  %616 = vrot.lane.b32.xlu0 %v569, 64
  %v617 = vpop.permute.xlu0 %616
  %v634 = vadd.f32 %v208, %v587
  %v635 = vadd.f32 %v209, %v589
  %v636 = vadd.f32 %v210, %v591
  %v637 = vadd.f32 %v211, %v593
  %v638 = vadd.f32 %v212, %v595
  %v639 = vadd.f32 %v213, %v597
  %v640 = vadd.f32 %v214, %v599
  %v641 = vadd.f32 %v215, %v601
  %v642 = vadd.f32 %v216, %v603
  %v643 = vadd.f32 %v217, %v605
  %v644 = vadd.f32 %v218, %v607
  %v645 = vadd.f32 %v219, %v609
  %v646 = vadd.f32 %v220, %v611
  %v647 = vadd.f32 %v221, %v613
  %v648 = vadd.f32 %v222, %v615
  %v649 = vadd.f32 %v223, %v617
  %v650 = vmax.f32 %v634, 0.0
  %v651 = vmax.f32 %v635, 0.0
  %v652 = vmax.f32 %v636, 0.0
  %v653 = vmax.f32 %v637, 0.0
  %v654 = vmax.f32 %v638, 0.0
  %v655 = vmax.f32 %v639, 0.0
  %v656 = vmax.f32 %v640, 0.0
  %v657 = vmax.f32 %v641, 0.0
  %v658 = vmax.f32 %v642, 0.0
  %v659 = vmax.f32 %v643, 0.0
  %v660 = vmax.f32 %v644, 0.0
  %v661 = vmax.f32 %v645, 0.0
  %v662 = vmax.f32 %v646, 0.0
  %v663 = vmax.f32 %v647, 0.0
  %v664 = vmax.f32 %v648, 0.0
  %v665 = vmax.f32 %v649, 0.0
  %s666 = scalar_lea.vmem %s3, 32
  %v667 = vld [vmem:[%s666] sm:$0xff]
  %v668 = vld [vmem:[%s666 + $0x8] sm:$0xff]
  %v669 = vld [vmem:[%s666 + $0x10] sm:$0xff]
  %v670 = vld [vmem:[%s666 + $0x18] sm:$0xff]
  %687 = vrot.lane.b32.xlu0 %v650, 64
  %v688 = vpop.permute.xlu0 %687
  %689 = vrot.lane.b32.xlu0 %v651, 64
  %v690 = vpop.permute.xlu0 %689
  %691 = vrot.lane.b32.xlu0 %v652, 64
  %v692 = vpop.permute.xlu0 %691
  %693 = vrot.lane.b32.xlu0 %v653, 64
  %v694 = vpop.permute.xlu0 %693
  %695 = vrot.lane.b32.xlu0 %v654, 64
  %v696 = vpop.permute.xlu0 %695
  %697 = vrot.lane.b32.xlu0 %v655, 64
  %v698 = vpop.permute.xlu0 %697
  %699 = vrot.lane.b32.xlu0 %v656, 64
  %v700 = vpop.permute.xlu0 %699
  %701 = vrot.lane.b32.xlu0 %v657, 64
  %v702 = vpop.permute.xlu0 %701
  %703 = vrot.lane.b32.xlu0 %v658, 64
  %v704 = vpop.permute.xlu0 %703
  %705 = vrot.lane.b32.xlu0 %v659, 64
  %v706 = vpop.permute.xlu0 %705
  %707 = vrot.lane.b32.xlu0 %v660, 64
  %v708 = vpop.permute.xlu0 %707
  %709 = vrot.lane.b32.xlu0 %v661, 64
  %v710 = vpop.permute.xlu0 %709
  %711 = vrot.lane.b32.xlu0 %v662, 64
  %v712 = vpop.permute.xlu0 %711
  %713 = vrot.lane.b32.xlu0 %v663, 64
  %v714 = vpop.permute.xlu0 %713
  %715 = vrot.lane.b32.xlu0 %v664, 64
  %v716 = vpop.permute.xlu0 %715
  %717 = vrot.lane.b32.xlu0 %v665, 64
  %v718 = vpop.permute.xlu0 %717
  %v719 = vsel %vm72, %v688, 0
  %v721 = vsel %vm72, %v690, 0
  %v723 = vsel %vm72, %v692, 0
  %v725 = vsel %vm72, %v694, 0
  %v727 = vsel %vm72, %v696, 0
  %v729 = vsel %vm72, %v698, 0
  %v731 = vsel %vm72, %v700, 0
  %v733 = vsel %vm72, %v702, 0
  %v735 = vsel %vm72, %v704, 0
  %v737 = vsel %vm72, %v706, 0
  %v739 = vsel %vm72, %v708, 0
  %v741 = vsel %vm72, %v710, 0
  %v743 = vsel %vm72, %v712, 0
  %v745 = vsel %vm72, %v714, 0
  %v747 = vsel %vm72, %v716, 0
  %v749 = vsel %vm72, %v718, 0
  %751 = vmatpush.msra.mxu0 0.0
  %752 = vmatpush.msra.mxu0 0.0
  %753 = vmatpush.msra.mxu0 0.0
  %754 = vmatpush.msra.mxu0 0.0
  %755 = vmatpush.msra.mxu0 0.0
  %756 = vmatpush.msra.mxu0 0.0
  %757 = vmatpush.msra.mxu0 0.0
  %758 = vmatpush.msra.mxu0 0.0
  %759 = vmatpush.msra.mxu0 0.0
  %760 = vmatpush.msra.mxu0 0.0
  %761 = vmatpush.msra.mxu0 0.0
  %762 = vmatpush.msra.mxu0 0.0
  %763 = vmatpush.msra.mxu0 %v670
  %764 = vmatpush.msra.mxu0 %v669
  %765 = vmatpush.msra.mxu0 %v668
  %766 = vmatpush.msra.mxu0 %v667
  %767 = vmatmul.f32.gmra.mxu0 %v719
  %v768 = vpop.f32.mrf.mxu0
  %v769 = vadd.f32 0.0, %v768
  %770 = vmatmul.f32.gmra.mxu0 %v721
  %v771 = vpop.f32.mrf.mxu0
  %v772 = vadd.f32 0.0, %v771
  %773 = vmatmul.f32.gmra.mxu0 %v723
  %v774 = vpop.f32.mrf.mxu0
  %v775 = vadd.f32 0.0, %v774
  %776 = vmatmul.f32.gmra.mxu0 %v725
  %v777 = vpop.f32.mrf.mxu0
  %v778 = vadd.f32 0.0, %v777
  %779 = vmatmul.f32.gmra.mxu0 %v727
  %v780 = vpop.f32.mrf.mxu0
  %v781 = vadd.f32 0.0, %v780
  %782 = vmatmul.f32.gmra.mxu0 %v729
  %v783 = vpop.f32.mrf.mxu0
  %v784 = vadd.f32 0.0, %v783
  %785 = vmatmul.f32.gmra.mxu0 %v731
  %v786 = vpop.f32.mrf.mxu0
  %v787 = vadd.f32 0.0, %v786
  %788 = vmatmul.f32.gmra.mxu0 %v733
  %v789 = vpop.f32.mrf.mxu0
  %v790 = vadd.f32 0.0, %v789
  %791 = vmatmul.f32.gmra.mxu0 %v735
  %v792 = vpop.f32.mrf.mxu0
  %v793 = vadd.f32 0.0, %v792
  %794 = vmatmul.f32.gmra.mxu0 %v737
  %v795 = vpop.f32.mrf.mxu0
  %v796 = vadd.f32 0.0, %v795
  %797 = vmatmul.f32.gmra.mxu0 %v739
  %v798 = vpop.f32.mrf.mxu0
  %v799 = vadd.f32 0.0, %v798
  %800 = vmatmul.f32.gmra.mxu0 %v741
  %v801 = vpop.f32.mrf.mxu0
  %v802 = vadd.f32 0.0, %v801
  %803 = vmatmul.f32.gmra.mxu0 %v743
  %v804 = vpop.f32.mrf.mxu0
  %v805 = vadd.f32 0.0, %v804
  %806 = vmatmul.f32.gmra.mxu0 %v745
  %v807 = vpop.f32.mrf.mxu0
  %v808 = vadd.f32 0.0, %v807
  %809 = vmatmul.f32.gmra.mxu0 %v747
  %v810 = vpop.f32.mrf.mxu0
  %v811 = vadd.f32 0.0, %v810
  %812 = vmatmul.f32.gmra.mxu0 %v749
  %v813 = vpop.f32.mrf.mxu0
  %v814 = vadd.f32 0.0, %v813
  %815 = vdwg.mxu0
  %v816 = vpack.c.bf16 %v769, %v769
  %v817 = vpack.c.bf16 %v772, %v772
  %v818 = vpack.c.bf16 %v775, %v775
  %v819 = vpack.c.bf16 %v778, %v778
  %v820 = vpack.c.bf16 %v781, %v781
  %v821 = vpack.c.bf16 %v784, %v784
  %v822 = vpack.c.bf16 %v787, %v787
  %v823 = vpack.c.bf16 %v790, %v790
  %v824 = vpack.c.bf16 %v793, %v793
  %v825 = vpack.c.bf16 %v796, %v796
  %v826 = vpack.c.bf16 %v799, %v799
  %v827 = vpack.c.bf16 %v802, %v802
  %v828 = vpack.c.bf16 %v805, %v805
  %v829 = vpack.c.bf16 %v808, %v808
  %v830 = vpack.c.bf16 %v811, %v811
  %v831 = vpack.c.bf16 %v814, %v814
  %s832 = scalar_lea.vmem %s4, 1
  %v833 = vld [vmem:[%s832] sm:$0x1]
  %v835 = vperm.slane %v833, 0
  %836 = vrot.lane.b32.xlu0 %v835, 64
  %v837 = vpop.permute.xlu0 %836
  %v839 = vadd.f32 %v769, %v837
  %v840 = vadd.f32 %v772, %v837
  %v841 = vadd.f32 %v775, %v837
  %v842 = vadd.f32 %v778, %v837
  %v843 = vadd.f32 %v781, %v837
  %v844 = vadd.f32 %v784, %v837
  %v845 = vadd.f32 %v787, %v837
  %v846 = vadd.f32 %v790, %v837
  %v847 = vadd.f32 %v793, %v837
  %v848 = vadd.f32 %v796, %v837
  %v849 = vadd.f32 %v799, %v837
  %v850 = vadd.f32 %v802, %v837
  %v851 = vadd.f32 %v805, %v837
  %v852 = vadd.f32 %v808, %v837
  %v853 = vadd.f32 %v811, %v837
  %v854 = vadd.f32 %v814, %v837
  %v871 = vunpack.c.l.b16 %v816
  %v872 = vunpack.c.l.b16 %v817
  %v873 = vunpack.c.l.b16 %v818
  %v874 = vunpack.c.l.b16 %v819
  %v875 = vunpack.c.l.b16 %v820
  %v876 = vunpack.c.l.b16 %v821
  %v877 = vunpack.c.l.b16 %v822
  %v878 = vunpack.c.l.b16 %v823
  %v879 = vunpack.c.l.b16 %v824
  %v880 = vunpack.c.l.b16 %v825
  %v881 = vunpack.c.l.b16 %v826
  %v882 = vunpack.c.l.b16 %v827
  %v883 = vunpack.c.l.b16 %v828
  %v884 = vunpack.c.l.b16 %v829
  %v885 = vunpack.c.l.b16 %v830
  %v886 = vunpack.c.l.b16 %v831
  %v887 = vpack.c.b16 %v872, %v871
  %v888 = vpack.c.b16 %v874, %v873
  %v889 = vpack.c.b16 %v876, %v875
  %v890 = vpack.c.b16 %v878, %v877
  %v891 = vpack.c.b16 %v880, %v879
  %v892 = vpack.c.b16 %v882, %v881
  %v893 = vpack.c.b16 %v884, %v883
  %v894 = vpack.c.b16 %v886, %v885
  %903 = vrot.lane.b32.xlu0 %v887, 96
  %v904 = vpop.permute.xlu0 %903
  %905 = vrot.lane.b32.xlu0 %v888, 96
  %v906 = vpop.permute.xlu0 %905
  %907 = vrot.lane.b32.xlu0 %v889, 96
  %v908 = vpop.permute.xlu0 %907
  %909 = vrot.lane.b32.xlu0 %v890, 96
  %v910 = vpop.permute.xlu0 %909
  %911 = vrot.lane.b32.xlu0 %v891, 96
  %v912 = vpop.permute.xlu0 %911
  %913 = vrot.lane.b32.xlu0 %v892, 96
  %v914 = vpop.permute.xlu0 %913
  %915 = vrot.lane.b32.xlu0 %v893, 96
  %v916 = vpop.permute.xlu0 %915
  %917 = vrot.lane.b32.xlu0 %v894, 96
  %v918 = vpop.permute.xlu0 %917
  %927 = vmatpush.bf16.msra.mxu0 %v894
  %928 = vmatpush.bf16.msra.mxu0 %v893
  %929 = vmatpush.bf16.msra.mxu0 %v892
  %930 = vmatpush.bf16.msra.mxu0 %v891
  %931 = vmatpush.bf16.msra.mxu0 %v890
  %932 = vmatpush.bf16.msra.mxu0 %v889
  %933 = vmatpush.bf16.msra.mxu0 %v888
  %934 = vmatpush.bf16.msra.mxu0 %v887
  %935 = vmatmul.bf16.gmra.mxu0 %v344
  %v936 = vpop.f32.mrf.mxu0
  %v937 = vadd.f32 0.0, %v936
  %v938 = vpop.f32.mrf.mxu0
  %v939 = vadd.f32 0.0, %v938
  %940 = vmatmul.bf16.gmra.mxu0 %v346
  %v941 = vpop.f32.mrf.mxu0
  %v942 = vadd.f32 0.0, %v941
  %v943 = vpop.f32.mrf.mxu0
  %v944 = vadd.f32 0.0, %v943
  %945 = vmatmul.bf16.gmra.mxu0 %v348
  %v946 = vpop.f32.mrf.mxu0
  %v947 = vadd.f32 0.0, %v946
  %v948 = vpop.f32.mrf.mxu0
  %v949 = vadd.f32 0.0, %v948
  %950 = vmatmul.bf16.gmra.mxu0 %v350
  %v951 = vpop.f32.mrf.mxu0
  %v952 = vadd.f32 0.0, %v951
  %v953 = vpop.f32.mrf.mxu0
  %v954 = vadd.f32 0.0, %v953
  %955 = vmatmul.bf16.gmra.mxu0 %v352
  %v956 = vpop.f32.mrf.mxu0
  %v957 = vadd.f32 0.0, %v956
  %v958 = vpop.f32.mrf.mxu0
  %v959 = vadd.f32 0.0, %v958
  %960 = vmatmul.bf16.gmra.mxu0 %v354
  %v961 = vpop.f32.mrf.mxu0
  %v962 = vadd.f32 0.0, %v961
  %v963 = vpop.f32.mrf.mxu0
  %v964 = vadd.f32 0.0, %v963
  %965 = vmatmul.bf16.gmra.mxu0 %v356
  %v966 = vpop.f32.mrf.mxu0
  %v967 = vadd.f32 0.0, %v966
  %v968 = vpop.f32.mrf.mxu0
  %v969 = vadd.f32 0.0, %v968
  %970 = vmatmul.bf16.gmra.mxu0 %v358
  %v971 = vpop.f32.mrf.mxu0
  %v972 = vadd.f32 0.0, %v971
  %v973 = vpop.f32.mrf.mxu0
  %v974 = vadd.f32 0.0, %v973
  %975 = vdwg.mxu0
  %976 = vmatpush.bf16.msra.mxu0 %v918
  %977 = vmatpush.bf16.msra.mxu0 %v916
  %978 = vmatpush.bf16.msra.mxu0 %v914
  %979 = vmatpush.bf16.msra.mxu0 %v912
  %980 = vmatpush.bf16.msra.mxu0 %v910
  %981 = vmatpush.bf16.msra.mxu0 %v908
  %982 = vmatpush.bf16.msra.mxu0 %v906
  %983 = vmatpush.bf16.msra.mxu0 %v904
  %984 = vmatmul.bf16.gmra.mxu0 %v345
  %v985 = vpop.f32.mrf.mxu0
  %v986 = vadd.f32 %v937, %v985
  %v987 = vpop.f32.mrf.mxu0
  %v988 = vadd.f32 %v939, %v987
  %989 = vmatmul.bf16.gmra.mxu0 %v347
  %v990 = vpop.f32.mrf.mxu0
  %v991 = vadd.f32 %v942, %v990
  %v992 = vpop.f32.mrf.mxu0
  %v993 = vadd.f32 %v944, %v992
  %994 = vmatmul.bf16.gmra.mxu0 %v349
  %v995 = vpop.f32.mrf.mxu0
  %v996 = vadd.f32 %v947, %v995
  %v997 = vpop.f32.mrf.mxu0
  %v998 = vadd.f32 %v949, %v997
  %999 = vmatmul.bf16.gmra.mxu0 %v351
  %v1000 = vpop.f32.mrf.mxu0
  %v1001 = vadd.f32 %v952, %v1000
  %v1002 = vpop.f32.mrf.mxu0
  %v1003 = vadd.f32 %v954, %v1002
  %1004 = vmatmul.bf16.gmra.mxu0 %v353
  %v1005 = vpop.f32.mrf.mxu0
  %v1006 = vadd.f32 %v957, %v1005
  %v1007 = vpop.f32.mrf.mxu0
  %v1008 = vadd.f32 %v959, %v1007
  %1009 = vmatmul.bf16.gmra.mxu0 %v355
  %v1010 = vpop.f32.mrf.mxu0
  %v1011 = vadd.f32 %v962, %v1010
  %v1012 = vpop.f32.mrf.mxu0
  %v1013 = vadd.f32 %v964, %v1012
  %1014 = vmatmul.bf16.gmra.mxu0 %v357
  %v1015 = vpop.f32.mrf.mxu0
  %v1016 = vadd.f32 %v967, %v1015
  %v1017 = vpop.f32.mrf.mxu0
  %v1018 = vadd.f32 %v969, %v1017
  %1019 = vmatmul.bf16.gmra.mxu0 %v359
  %v1020 = vpop.f32.mrf.mxu0
  %v1021 = vadd.f32 %v972, %v1020
  %v1022 = vpop.f32.mrf.mxu0
  %v1023 = vadd.f32 %v974, %v1022
  %1024 = vdwg.mxu0
  %v1025 = vmul.f32 %v986, %v477
  %v1026 = vmul.f32 %v988, %v482
  %v1027 = vmul.f32 %v991, %v487
  %v1028 = vmul.f32 %v993, %v492
  %v1029 = vmul.f32 %v996, %v497
  %v1030 = vmul.f32 %v998, %v502
  %v1031 = vmul.f32 %v1001, %v507
  %v1032 = vmul.f32 %v1003, %v512
  %v1033 = vmul.f32 %v1006, %v517
  %v1034 = vmul.f32 %v1008, %v522
  %v1035 = vmul.f32 %v1011, %v527
  %v1036 = vmul.f32 %v1013, %v532
  %v1037 = vmul.f32 %v1016, %v537
  %v1038 = vmul.f32 %v1018, %v542
  %v1039 = vmul.f32 %v1021, %v547
  %v1040 = vmul.f32 %v1023, %v552
  %1057 = vrot.lane.b32.xlu0 %v1025, 64
  %v1058 = vpop.permute.xlu0 %1057
  %1059 = vrot.lane.b32.xlu0 %v1026, 64
  %v1060 = vpop.permute.xlu0 %1059
  %1061 = vrot.lane.b32.xlu0 %v1027, 64
  %v1062 = vpop.permute.xlu0 %1061
  %1063 = vrot.lane.b32.xlu0 %v1028, 64
  %v1064 = vpop.permute.xlu0 %1063
  %1065 = vrot.lane.b32.xlu0 %v1029, 64
  %v1066 = vpop.permute.xlu0 %1065
  %1067 = vrot.lane.b32.xlu0 %v1030, 64
  %v1068 = vpop.permute.xlu0 %1067
  %1069 = vrot.lane.b32.xlu0 %v1031, 64
  %v1070 = vpop.permute.xlu0 %1069
  %1071 = vrot.lane.b32.xlu0 %v1032, 64
  %v1072 = vpop.permute.xlu0 %1071
  %1073 = vrot.lane.b32.xlu0 %v1033, 64
  %v1074 = vpop.permute.xlu0 %1073
  %1075 = vrot.lane.b32.xlu0 %v1034, 64
  %v1076 = vpop.permute.xlu0 %1075
  %1077 = vrot.lane.b32.xlu0 %v1035, 64
  %v1078 = vpop.permute.xlu0 %1077
  %1079 = vrot.lane.b32.xlu0 %v1036, 64
  %v1080 = vpop.permute.xlu0 %1079
  %1081 = vrot.lane.b32.xlu0 %v1037, 64
  %v1082 = vpop.permute.xlu0 %1081
  %1083 = vrot.lane.b32.xlu0 %v1038, 64
  %v1084 = vpop.permute.xlu0 %1083
  %1085 = vrot.lane.b32.xlu0 %v1039, 64
  %v1086 = vpop.permute.xlu0 %1085
  %1087 = vrot.lane.b32.xlu0 %v1040, 64
  %v1088 = vpop.permute.xlu0 %1087
  %v1105 = vadd.f32 %v839, %v1058
  %v1106 = vadd.f32 %v840, %v1060
  %v1107 = vadd.f32 %v841, %v1062
  %v1108 = vadd.f32 %v842, %v1064
  %v1109 = vadd.f32 %v843, %v1066
  %v1110 = vadd.f32 %v844, %v1068
  %v1111 = vadd.f32 %v845, %v1070
  %v1112 = vadd.f32 %v846, %v1072
  %v1113 = vadd.f32 %v847, %v1074
  %v1114 = vadd.f32 %v848, %v1076
  %v1115 = vadd.f32 %v849, %v1078
  %v1116 = vadd.f32 %v850, %v1080
  %v1117 = vadd.f32 %v851, %v1082
  %v1118 = vadd.f32 %v852, %v1084
  %v1119 = vadd.f32 %v853, %v1086
  %v1120 = vadd.f32 %v854, %v1088
  %1137 = vrot.lane.b32.xlu0 %v1105, 64
  %v1138 = vpop.permute.xlu0 %1137
  %1139 = vrot.lane.b32.xlu0 %v1106, 64
  %v1140 = vpop.permute.xlu0 %1139
  %1141 = vrot.lane.b32.xlu0 %v1107, 64
  %v1142 = vpop.permute.xlu0 %1141
  %1143 = vrot.lane.b32.xlu0 %v1108, 64
  %v1144 = vpop.permute.xlu0 %1143
  %1145 = vrot.lane.b32.xlu0 %v1109, 64
  %v1146 = vpop.permute.xlu0 %1145
  %1147 = vrot.lane.b32.xlu0 %v1110, 64
  %v1148 = vpop.permute.xlu0 %1147
  %1149 = vrot.lane.b32.xlu0 %v1111, 64
  %v1150 = vpop.permute.xlu0 %1149
  %1151 = vrot.lane.b32.xlu0 %v1112, 64
  %v1152 = vpop.permute.xlu0 %1151
  %1153 = vrot.lane.b32.xlu0 %v1113, 64
  %v1154 = vpop.permute.xlu0 %1153
  %1155 = vrot.lane.b32.xlu0 %v1114, 64
  %v1156 = vpop.permute.xlu0 %1155
  %1157 = vrot.lane.b32.xlu0 %v1115, 64
  %v1158 = vpop.permute.xlu0 %1157
  %1159 = vrot.lane.b32.xlu0 %v1116, 64
  %v1160 = vpop.permute.xlu0 %1159
  %1161 = vrot.lane.b32.xlu0 %v1117, 64
  %v1162 = vpop.permute.xlu0 %1161
  %1163 = vrot.lane.b32.xlu0 %v1118, 64
  %v1164 = vpop.permute.xlu0 %1163
  %1165 = vrot.lane.b32.xlu0 %v1119, 64
  %v1166 = vpop.permute.xlu0 %1165
  %1167 = vrot.lane.b32.xlu0 %v1120, 64
  %v1168 = vpop.permute.xlu0 %1167
  %1185 = vst.msk [vmem:[%s5] sm:$0xff] %vm72, %v1138
  %1186 = vst.msk [vmem:[%s5 + $0x8] sm:$0xff] %vm72, %v1140
  %1187 = vst.msk [vmem:[%s5 + $0x10] sm:$0xff] %vm72, %v1142
  %1188 = vst.msk [vmem:[%s5 + $0x18] sm:$0xff] %vm72, %v1144
  %1189 = vst.msk [vmem:[%s5 + $0x20] sm:$0xff] %vm72, %v1146
  %1190 = vst.msk [vmem:[%s5 + $0x28] sm:$0xff] %vm72, %v1148
  %1191 = vst.msk [vmem:[%s5 + $0x30] sm:$0xff] %vm72, %v1150
  %1192 = vst.msk [vmem:[%s5 + $0x38] sm:$0xff] %vm72, %v1152
  %1193 = vst.msk [vmem:[%s5 + $0x40] sm:$0xff] %vm72, %v1154
  %1194 = vst.msk [vmem:[%s5 + $0x48] sm:$0xff] %vm72, %v1156
  %1195 = vst.msk [vmem:[%s5 + $0x50] sm:$0xff] %vm72, %v1158
  %1196 = vst.msk [vmem:[%s5 + $0x58] sm:$0xff] %vm72, %v1160
  %1197 = vst.msk [vmem:[%s5 + $0x60] sm:$0xff] %vm72, %v1162
  %1198 = vst.msk [vmem:[%s5 + $0x68] sm:$0xff] %vm72, %v1164
  %1199 = vst.msk [vmem:[%s5 + $0x70] sm:$0xff] %vm72, %v1166
  %1200 = vst.msk [vmem:[%s5 + $0x78] sm:$0xff] %vm72, %v1168
  // Predicated region
  $region22: #{tpu_custom_call.1} parent=0 // pred_check
    _
  $region23: #{tpu_custom_call.1} parent=0 // pred_check_branch
    %1202 = sbr.rel (0) target = $region25
  $region24: #{tpu_custom_call.1} parent=0 // pred_region
    _
  $region25: #{tpu_custom_call.1} parent=0 // pred_fallthru
    _
  // Predicated region
  $region26: #{tpu_custom_call.1} parent=0 // pred_check
    _
  $region27: #{tpu_custom_call.1} parent=0 // pred_check_branch
    %1204 = sbr.rel (0) target = $region29
  $region28: #{tpu_custom_call.1} parent=0 // pred_region
    _
  $region29: #{tpu_custom_call.1} parent=0 // pred_fallthru
    _

</llo_original>
